<compile_context>
chip_gen: v7x
topology: tpu7x:2x2x1
jax: 0.10.0
libtpu: 0.0.40
codegen_flags: <defaults>
</compile_context>

<pallas_src>
import jax
import jax.numpy as jnp
from jax.experimental import pallas as pl
from jax.experimental.pallas import tpu as pltpu

BN_EPS = 1e-5


def _round_up(v, m):
    return ((v + m - 1) // m) * m


def _anl_kernel(x_ref, w_ref, gamma_ref, beta_ref, o_ref, acc_ref):
    """One (C_out tile, K tile) grid step: accumulate x@w; finalize BN+ReLU on last K."""
    k = pl.program_id(1)

    @pl.when(k == 0)
    def _init():
        acc_ref[...] = jnp.zeros_like(acc_ref)

    # MXU matmul: bf16 inputs, f32 accumulation (avoids f32-matmul emulation on v5e,
    # hits bf16 peak on v6e/v7x, halves x/w tile bytes).
    acc_ref[...] += jnp.dot(x_ref[...], w_ref[...],
                            preferred_element_type=jnp.float32)

    @pl.when(k == pl.num_programs(1) - 1)
    def _finalize():
        y = acc_ref[...]                                  # (N, TN) f32
        inv_n = 1.0 / y.shape[0]
        # One-pass batch statistics (biased variance, matching BatchNorm1d training
        # normalization). The Linear bias is omitted: cancelled by mean subtraction.
        sum_y = jnp.sum(y, axis=0, keepdims=True)
        sum_yy = jnp.sum(y * y, axis=0, keepdims=True)
        mean = sum_y * inv_n
        var = sum_yy * inv_n - mean * mean
        inv_std = jax.lax.rsqrt(var + BN_EPS)             # EUP slot (cheap)
        scale = gamma_ref[...] * inv_std                  # (1, TN)
        shift = beta_ref[...] - mean * scale              # (1, TN)
        out = y * scale + shift                           # single FMA pass over tile
        o_ref[...] = jnp.maximum(out, 0.0).astype(o_ref.dtype)


def activated_norm_linear(x, w, b, gamma, beta, *, tn=128, tk=128,
                          out_dtype=jnp.float32):
    """x: (N, C_in), w: (C_in, C_out), b/gamma/beta: (C_out,) -> (N, C_out).

    `b` is accepted for API parity with nn.Linear but is mathematically cancelled
    by the BatchNorm mean subtraction, so it never reaches the kernel.
    """
    del b  # cancelled by BN mean subtraction
    n, c_in = x.shape
    c_out = w.shape[1]

    # Pad to lane/MXU-friendly tiles (zero padding does not change real outputs;
    # padded output columns are sliced off at the end).
    c_in_p = _round_up(c_in, tk)
    c_out_p = _round_up(c_out, tn)

    x_p = jnp.pad(x.astype(jnp.bfloat16), ((0, 0), (0, c_in_p - c_in)))
    w_p = jnp.pad(w.astype(jnp.bfloat16),
                  ((0, c_in_p - c_in), (0, c_out_p - c_out)))
    g_p = jnp.pad(gamma.astype(jnp.float32), (0, c_out_p - c_out)).reshape(1, c_out_p)
    be_p = jnp.pad(beta.astype(jnp.float32), (0, c_out_p - c_out)).reshape(1, c_out_p)

    grid = (c_out_p // tn, c_in_p // tk)  # (output-feature tiles, K tiles)

    cost = pl.CostEstimate(
        flops=2 * n * c_in_p * c_out_p,
        transcendentals=c_out_p,  # one rsqrt per output feature
        bytes_accessed=(x_p.size * 2 * grid[0] + w_p.size * 2
                        + (g_p.size + be_p.size) * 4 + n * c_out_p * 4),
    )

    out_p = pl.pallas_call(
        _anl_kernel,
        out_shape=jax.ShapeDtypeStruct((n, c_out_p), out_dtype),
        grid_spec=pltpu.PrefetchScalarGridSpec(
            num_scalar_prefetch=0,
            grid=grid,
            in_specs=[
                pl.BlockSpec((n, tk), lambda j, k: (0, k)),    # x  (full batch, K tile)
                pl.BlockSpec((tk, tn), lambda j, k: (k, j)),   # w
                pl.BlockSpec((1, tn), lambda j, k: (0, j)),    # gamma
                pl.BlockSpec((1, tn), lambda j, k: (0, j)),    # beta
            ],
            out_specs=pl.BlockSpec((n, tn), lambda j, k: (0, j)),
            scratch_shapes=[pltpu.VMEM((n, tn), jnp.float32)],  # f32 accumulator
        ),
        compiler_params=pltpu.CompilerParams(
            # C_out tiles are independent -> parallel; K carries the accumulator -> arbitrary.
            dimension_semantics=("parallel", "arbitrary"),
            # Explicit scoped-VMEM budget with headroom; safe on v5e/v6e/v7x.
            vmem_limit_bytes=32 * 1024 * 1024,
        ),
        cost_estimate=cost,
    )(x_p, w_p, g_p, be_p)

    return out_p[:, :c_out]


def _reference(x, w, b, gamma, beta):
    # Same bf16-input matmul (f32 accumulate) so the comparison is apples-to-apples.
    y = jnp.dot(x.astype(jnp.bfloat16), w.astype(jnp.bfloat16),
                preferred_element_type=jnp.float32) + b
    mean = jnp.mean(y, axis=0, keepdims=True)
    var = jnp.mean((y - mean) ** 2, axis=0, keepdims=True)
    y_hat = (y - mean) / jnp.sqrt(var + BN_EPS)
    return jnp.maximum(y_hat * gamma + beta, 0.0)


if __name__ == "__main__":
    batch, in_channels, out_channels = 8, 32, 32

    key = jax.random.PRNGKey(0)
    kx, kw, kb = jax.random.split(key, 3)

    x = jax.random.normal(kx, (batch, in_channels), dtype=jnp.float32)

    # Deterministic init mimicking nn.Linear defaults (uniform +-1/sqrt(in)).
    bound = 1.0 / jnp.sqrt(jnp.float32(in_channels))
    w = jax.random.uniform(kw, (in_channels, out_channels), jnp.float32, -bound, bound)
    b = jax.random.uniform(kb, (out_channels,), jnp.float32, -bound, bound)
    # BatchNorm1d defaults: gamma = 1, beta = 0.
    gamma = jnp.ones((out_channels,), jnp.float32)
    beta = jnp.zeros((out_channels,), jnp.float32)

    out = activated_norm_linear(x, w, b, gamma, beta)
    out = jax.block_until_ready(out)

    ref = _reference(x, w, b, gamma, beta)
    assert out.shape == (batch, out_channels)
    assert jnp.allclose(out, ref, atol=2e-3, rtol=2e-3), "mismatch vs reference"

    print("KERNEL_OK")
</pallas_src>

<mosaic_0001>
module attributes {stable_mosaic.version = 11 : i64} {
  func.func @_anl_kernel(%arg0: i32, %arg1: i32, %arg2: memref<8x128xbf16, #tpu.memory_space<vmem>>, %arg3: memref<128x128xbf16, #tpu.memory_space<vmem>>, %arg4: memref<1x128xf32, #tpu.memory_space<vmem>>, %arg5: memref<1x128xf32, #tpu.memory_space<vmem>>, %arg6: memref<8x128xf32, #tpu.memory_space<vmem>>, %arg7: memref<8x128xf32, #tpu.memory_space<vmem>>) attributes {dimension_semantics = [#tpu.dimension_semantics<parallel>, #tpu.dimension_semantics<arbitrary>], iteration_bounds = array<i64: 1, 1>, scalar_prefetch = 0 : i64, scratch_operands = 1 : i64, tpu.core_type = #tpu.core_type<tc>, window_params = [{transform_indices = @transform_0, window_bounds = array<i64: 8, 128>}, {transform_indices = @transform_1, window_bounds = array<i64: 128, 128>}, {transform_indices = @transform_2, window_bounds = array<i64: 1, 128>}, {transform_indices = @transform_3, window_bounds = array<i64: 1, 128>}, {transform_indices = @transform_4, window_bounds = array<i64: 8, 128>}]} {
    %c0_i32 = arith.constant 0 : i32
    %0 = arith.cmpi eq, %arg1, %c0_i32 : i32
    %1 = arith.extui %0 : i1 to i32
    %c0_i32_0 = arith.constant 0 : i32
    %2 = arith.cmpi ne, %1, %c0_i32_0 : i32
    scf.if %2 {
      %cst_10 = arith.constant 0.000000e+00 : f32
      %12 = vector.broadcast %cst_10 : f32 to vector<8x128xf32>
      %c0_11 = arith.constant 0 : index
      %c0_12 = arith.constant 0 : index
      %13 = vector.load %arg7[%c0_11, %c0_12] : memref<8x128xf32, #tpu.memory_space<vmem>>, vector<8x128xf32>
      tpu.vector_store %arg7[%c0_11, %c0_12], %12 {strides = array<i32>} : memref<8x128xf32, #tpu.memory_space<vmem>>, vector<8x128xf32>,
    } else {
    }
    %c0 = arith.constant 0 : index
    %c0_1 = arith.constant 0 : index
    %3 = vector.load %arg7[%c0, %c0_1] : memref<8x128xf32, #tpu.memory_space<vmem>>, vector<8x128xf32>
    %c0_2 = arith.constant 0 : index
    %c0_3 = arith.constant 0 : index
    %4 = vector.load %arg2[%c0_2, %c0_3] : memref<8x128xbf16, #tpu.memory_space<vmem>>, vector<8x128xbf16>
    %c0_4 = arith.constant 0 : index
    %c0_5 = arith.constant 0 : index
    %5 = vector.load %arg3[%c0_4, %c0_5] : memref<128x128xbf16, #tpu.memory_space<vmem>>, vector<128x128xbf16>
    %cst = arith.constant dense<0.000000e+00> : vector<8x128xf32>
    %6 = tpu.matmul %4, %5, %cst {dimension_numbers = #tpu.dot_dimension_numbers<[1], [0], [0], [1], [0, 0, 1, 1], [], []>} : vector<8x128xbf16>, vector<128x128xbf16>, vector<8x128xf32> -> vector<8x128xf32>
    %7 = arith.addf %3, %6 : vector<8x128xf32>
    %c0_6 = arith.constant 0 : index
    %c0_7 = arith.constant 0 : index
    %8 = vector.load %arg7[%c0_6, %c0_7] : memref<8x128xf32, #tpu.memory_space<vmem>>, vector<8x128xf32>
    tpu.vector_store %arg7[%c0_6, %c0_7], %7 {strides = array<i32>} : memref<8x128xf32, #tpu.memory_space<vmem>>, vector<8x128xf32>,
    %c0_i32_8 = arith.constant 0 : i32
    %9 = arith.cmpi eq, %arg1, %c0_i32_8 : i32
    %10 = arith.extui %9 : i1 to i32
    %c0_i32_9 = arith.constant 0 : i32
    %11 = arith.cmpi ne, %10, %c0_i32_9 : i32
    scf.if %11 {
      %c0_10 = arith.constant 0 : index
      %c0_11 = arith.constant 0 : index
      %12 = vector.load %arg7[%c0_10, %c0_11] : memref<8x128xf32, #tpu.memory_space<vmem>>, vector<8x128xf32>
      %cst_12 = arith.constant dense<0.000000e+00> : vector<128xf32>
      %13 = vector.multi_reduction <add>, %12, %cst_12 [0] : vector<8x128xf32> to vector<128xf32>
      %14 = vector.shape_cast %13 : vector<128xf32> to vector<1x128xf32>
      %15 = arith.mulf %12, %12 : vector<8x128xf32>
      %cst_13 = arith.constant dense<0.000000e+00> : vector<128xf32>
      %16 = vector.multi_reduction <add>, %15, %cst_13 [0] : vector<8x128xf32> to vector<128xf32>
      %17 = vector.shape_cast %16 : vector<128xf32> to vector<1x128xf32>
      %cst_14 = arith.constant 1.250000e-01 : f32
      %18 = vector.broadcast %cst_14 : f32 to vector<1x128xf32>
      %19 = arith.mulf %14, %18 : vector<1x128xf32>
      %cst_15 = arith.constant 1.250000e-01 : f32
      %20 = vector.broadcast %cst_15 : f32 to vector<1x128xf32>
      %21 = arith.mulf %17, %20 : vector<1x128xf32>
      %22 = arith.mulf %19, %19 : vector<1x128xf32>
      %23 = arith.subf %21, %22 : vector<1x128xf32>
      %cst_16 = arith.constant 9.99999974E-6 : f32
      %24 = vector.broadcast %cst_16 : f32 to vector<1x128xf32>
      %25 = arith.addf %23, %24 : vector<1x128xf32>
      %26 = math.rsqrt %25 : vector<1x128xf32>
      %c0_17 = arith.constant 0 : index
      %c0_18 = arith.constant 0 : index
      %27 = vector.load %arg4[%c0_17, %c0_18] : memref<1x128xf32, #tpu.memory_space<vmem>>, vector<1x128xf32>
      %28 = arith.mulf %27, %26 : vector<1x128xf32>
      %c0_19 = arith.constant 0 : index
      %c0_20 = arith.constant 0 : index
      %29 = vector.load %arg5[%c0_19, %c0_20] : memref<1x128xf32, #tpu.memory_space<vmem>>, vector<1x128xf32>
      %30 = arith.mulf %19, %28 : vector<1x128xf32>
      %31 = arith.subf %29, %30 : vector<1x128xf32>
      %32 = vector.broadcast %28 : vector<1x128xf32> to vector<8x128xf32>
      %33 = arith.mulf %12, %32 : vector<8x128xf32>
      %34 = vector.broadcast %31 : vector<1x128xf32> to vector<8x128xf32>
      %35 = arith.addf %33, %34 : vector<8x128xf32>
      %cst_21 = arith.constant 0.000000e+00 : f32
      %36 = vector.broadcast %cst_21 : f32 to vector<8x128xf32>
      %37 = arith.maximumf %35, %36 : vector<8x128xf32>
      %c0_22 = arith.constant 0 : index
      %c0_23 = arith.constant 0 : index
      %38 = vector.load %arg6[%c0_22, %c0_23] : memref<8x128xf32, #tpu.memory_space<vmem>>, vector<8x128xf32>
      tpu.vector_store %arg6[%c0_22, %c0_23], %37 {strides = array<i32>} : memref<8x128xf32, #tpu.memory_space<vmem>>, vector<8x128xf32>,
    } else {
    }
    return
  }
  func.func @transform_0(%arg0: i32, %arg1: i32) -> (i32, i32) {
    %c0_i32 = arith.constant 0 : i32
    %c0_i32_0 = arith.constant 0 : i32
    return %c0_i32, %arg1 : i32, i32
  }
  func.func @transform_1(%arg0: i32, %arg1: i32) -> (i32, i32) {
    %c0_i32 = arith.constant 0 : i32
    return %arg1, %arg0 : i32, i32
  }
  func.func @transform_2(%arg0: i32, %arg1: i32) -> (i32, i32) {
    %c0_i32 = arith.constant 0 : i32
    %c0_i32_0 = arith.constant 0 : i32
    return %c0_i32, %arg0 : i32, i32
  }
  func.func @transform_3(%arg0: i32, %arg1: i32) -> (i32, i32) {
    %c0_i32 = arith.constant 0 : i32
    %c0_i32_0 = arith.constant 0 : i32
    return %c0_i32, %arg0 : i32, i32
  }
  func.func @transform_4(%arg0: i32, %arg1: i32) -> (i32, i32) {
    %c0_i32 = arith.constant 0 : i32
    %c0_i32_0 = arith.constant 0 : i32
    return %c0_i32, %arg0 : i32, i32
  }
}

</mosaic_0001>

<llo_original>
// kernel: tpu_custom_call.1
$region0: #{tpu_custom_call.1}
  #allocation0 [shape = 'u32[]', space=smem, size = 0x4, offset = 0x4, fixed_abs, tag = 'smem constant byte address 0x4 - core index']
  #allocation1 [shape = 'u32[144,128]{1,0:T(1,128)}', space=vmem, size = 0x12000, scoped, tag = 'internal scratch']
  #allocation2 [shape = 'f32[8,128]{1,0:T(8,128)}', space=vmem, size = 0x1000, scoped, tag = 'scratch operand']
  %s0 = inlined_call_operand.hbm [shape: bf16[8,128], index: 0, kind: input, shape index: {}]
  %s1 = inlined_call_operand.hbm [shape: bf16[128,128], index: 1, kind: input, shape index: {}]
  %s2 = inlined_call_operand.vmem [shape: f32[1,128], index: 2, kind: input, shape index: {}]
  %s3 = inlined_call_operand.vmem [shape: f32[1,128], index: 3, kind: input, shape index: {}]
  %s4 = inlined_call_operand.hbm [shape: f32[8,128], index: 4, kind: output, shape index: {}]
  %s5 = sld [smem:[#allocation0]]
  $region42: #{tpu_custom_call.1} parent=0
    _
  %s7 = ssub.s32 1, %s5
  %s8 = scalar_select 0, %s7, %s5
  $region1: #{tpu_custom_call.1} parent=0
    #allocation3 [shape = 'u8[2048]{0}', space=vmem, size = 0x800, scoped, tag = 'input window, operand 0, single buffered']
    #allocation4 [shape = 's32[1]{0}', space=sflag, size = 0x4, scoped, tag = 'scoped memory for tpu_custom_call.1']
    #allocation5 [shape = 's32[1]{0}', space=sflag, size = 0x4, scoped, tag = 'scoped memory for tpu_custom_call.1']
    #allocation6 [shape = 'u8[32768]{0}', space=vmem, size = 0x8000, scoped, tag = 'input window, operand 1, single buffered']
    #allocation7 [shape = 's32[1]{0}', space=sflag, size = 0x4, scoped, tag = 'scoped memory for tpu_custom_call.1']
    #allocation8 [shape = 'u8[4096]{0}', space=vmem, size = 0x1000, scoped, tag = 'output window, operand 0, single buffered']
    %9 = vsyncpa [#allocation4], 0
    %10 = vsyncpa [#allocation7], 0
    %11 = vsyncpa [#allocation5], 0
    // Predicated region
    $region2: #{tpu_custom_call.1} parent=1 // pred_check
      _
    $region3: #{tpu_custom_call.1} parent=1 // pred_check_branch
      %13 = sbr.rel (0) target = $region5
    $region4: #{tpu_custom_call.1} parent=1 // pred_region
      %s15 = ssub.s32 64, 64
      %16 = vsyncadd [#allocation4], %s15
      %s18 = sshll.u32 [#allocation3], 4
      %s19 = int_to_ptr.vmem [resolvable:$true] %s18
      %21 = dma.hbm_to_vmem [thread:$0]  %s0, 64, %s19, [#allocation4]
    $region5: #{tpu_custom_call.1} parent=1 // pred_fallthru
      _
    // Predicated region
    $region6: #{tpu_custom_call.1} parent=1 // pred_check
      _
    $region7: #{tpu_custom_call.1} parent=1 // pred_check_branch
      %23 = sbr.rel (0) target = $region9
    $region8: #{tpu_custom_call.1} parent=1 // pred_region
      %s25 = ssub.s32 1024, 1024
      %26 = vsyncadd [#allocation7], %s25
      %s27 = sshll.u32 [#allocation6], 4
      %s28 = int_to_ptr.vmem [resolvable:$true] %s27
      %33 = dma.hbm_to_vmem [thread:$0]  %s1, 1024, %s28, [#allocation7], 64, 64, 4
    $region9: #{tpu_custom_call.1} parent=1 // pred_fallthru
      _
    // Predicated region
    $region10: #{tpu_custom_call.1} parent=1 // pred_check
      _
    $region11: #{tpu_custom_call.1} parent=1 // pred_check_branch
      %35 = sbr.rel (0) target = $region13
    $region12: #{tpu_custom_call.1} parent=1 // pred_region
      _
    $region13: #{tpu_custom_call.1} parent=1 // pred_fallthru
      _
    // Predicated region
    $region14: #{tpu_custom_call.1} parent=1 // pred_check
      _
    $region15: #{tpu_custom_call.1} parent=1 // pred_check_branch
      %37 = sbr.rel (0) target = $region17
    $region16: #{tpu_custom_call.1} parent=1 // pred_region
      _
    $region17: #{tpu_custom_call.1} parent=1 // pred_fallthru
      _
    // Predicated region
    $region18: #{tpu_custom_call.1} parent=1 // pred_check
      _
    $region19: #{tpu_custom_call.1} parent=1 // pred_check_branch
      %39 = sbr.rel (0) target = $region21
    $region20: #{tpu_custom_call.1} parent=1 // pred_region
      %40 = dma.done [#allocation4], 64
    $region21: #{tpu_custom_call.1} parent=1 // pred_fallthru
      _
    // Predicated region
    $region22: #{tpu_custom_call.1} parent=1 // pred_check
      _
    $region23: #{tpu_custom_call.1} parent=1 // pred_check_branch
      %42 = sbr.rel (0) target = $region25
    $region24: #{tpu_custom_call.1} parent=1 // pred_region
      %43 = dma.done [#allocation7], 1024
    $region25: #{tpu_custom_call.1} parent=1 // pred_fallthru
      _
    %p45 = scmp.eq.s32.totalorder 0, 0
    // Predicated region
    $region26: #{tpu_custom_call.1} parent=1 // pred_check
      %p46 = pneg %p45
    $region27: #{tpu_custom_call.1} parent=1 // pred_check_branch
      %48 = sbr.rel (%p46) target = $region29
    $region28: #{tpu_custom_call.1} parent=1 // pred_region
      %49 = vst [vmem:[#allocation2] sm:$0xff] 0.0
    $region29: #{tpu_custom_call.1} parent=1 // pred_fallthru
      _
    %v50 = vld [vmem:[#allocation2] sm:$0xff]
    %v51 = vld [vmem:[#allocation3] sm:$0xf]
    %v52 = vld [vmem:[#allocation6] sm:$0xf]
    %v53 = vld [vmem:[#allocation6 + $0x4] sm:$0xf]
    %v54 = vld [vmem:[#allocation6 + $0x8] sm:$0xf]
    %v55 = vld [vmem:[#allocation6 + $0xc] sm:$0xf]
    %v56 = vld [vmem:[#allocation6 + $0x10] sm:$0xf]
    %v57 = vld [vmem:[#allocation6 + $0x14] sm:$0xf]
    %v58 = vld [vmem:[#allocation6 + $0x18] sm:$0xf]
    %v59 = vld [vmem:[#allocation6 + $0x1c] sm:$0xf]
    %v60 = vld [vmem:[#allocation6 + $0x20] sm:$0xf]
    %v61 = vld [vmem:[#allocation6 + $0x24] sm:$0xf]
    %v62 = vld [vmem:[#allocation6 + $0x28] sm:$0xf]
    %v63 = vld [vmem:[#allocation6 + $0x2c] sm:$0xf]
    %v64 = vld [vmem:[#allocation6 + $0x30] sm:$0xf]
    %v65 = vld [vmem:[#allocation6 + $0x34] sm:$0xf]
    %v66 = vld [vmem:[#allocation6 + $0x38] sm:$0xf]
    %v67 = vld [vmem:[#allocation6 + $0x3c] sm:$0xf]
    %v84 = vunpack.c.l.b16 %v52
    %v85 = vunpack.c.l.b16 %v53
    %v86 = vunpack.c.l.b16 %v54
    %v87 = vunpack.c.l.b16 %v55
    %v88 = vunpack.c.l.b16 %v56
    %v89 = vunpack.c.l.b16 %v57
    %v90 = vunpack.c.l.b16 %v58
    %v91 = vunpack.c.l.b16 %v59
    %v92 = vunpack.c.l.b16 %v60
    %v93 = vunpack.c.l.b16 %v61
    %v94 = vunpack.c.l.b16 %v62
    %v95 = vunpack.c.l.b16 %v63
    %v96 = vunpack.c.l.b16 %v64
    %v97 = vunpack.c.l.b16 %v65
    %v98 = vunpack.c.l.b16 %v66
    %v99 = vunpack.c.l.b16 %v67
    %v100 = vpack.c.b16 %v85, %v84
    %v101 = vpack.c.b16 %v87, %v86
    %v102 = vpack.c.b16 %v89, %v88
    %v103 = vpack.c.b16 %v91, %v90
    %v104 = vpack.c.b16 %v93, %v92
    %v105 = vpack.c.b16 %v95, %v94
    %v106 = vpack.c.b16 %v97, %v96
    %v107 = vpack.c.b16 %v99, %v98
    %116 = vmatprep.subr.bf16.mxu0 0
    %117 = vmatpush1.bf16.msra.mxu0 %v100
    %118 = vmatprep.subr.bf16.mxu0 0
    %119 = vmatpush1.bf16.msra.mxu0 %v101
    %120 = vmatprep.subr.bf16.mxu0 0
    %121 = vmatpush1.bf16.msra.mxu0 %v102
    %122 = vmatprep.subr.bf16.mxu0 0
    %123 = vmatpush1.bf16.msra.mxu0 %v103
    %124 = vmatprep.subr.bf16.mxu0 0
    %125 = vmatpush1.bf16.msra.mxu0 %v104
    %126 = vmatprep.subr.bf16.mxu0 0
    %127 = vmatpush1.bf16.msra.mxu0 %v105
    %128 = vmatprep.subr.bf16.mxu0 0
    %129 = vmatpush1.bf16.msra.mxu0 %v106
    %130 = vmatprep.subr.bf16.mxu0 0
    %131 = vmatpush1.bf16.msra.mxu0 %v107
    %132 = vmatprep.subr.bf16.mxu0 0
    %133 = vmatpush1.bf16.msra.mxu0 0
    %134 = vmatprep.subr.bf16.mxu0 0
    %135 = vmatpush1.bf16.msra.mxu0 0
    %136 = vmatprep.subr.bf16.mxu0 0
    %137 = vmatpush1.bf16.msra.mxu0 0
    %138 = vmatprep.subr.bf16.mxu0 0
    %139 = vmatpush1.bf16.msra.mxu0 0
    %140 = vmatprep.subr.bf16.mxu0 0
    %141 = vmatpush1.bf16.msra.mxu0 0
    %142 = vmatprep.subr.bf16.mxu0 0
    %143 = vmatpush1.bf16.msra.mxu0 0
    %144 = vmatprep.subr.bf16.mxu0 0
    %145 = vmatpush1.bf16.msra.mxu0 0
    %146 = vmatprep.subr.bf16.mxu0 0
    %147 = vmatpush1.bf16.msra.mxu0 0
    %148 = vmatprep.mubr.bf16.mxu0 0
    %149 = vmatmul.mubr.bf16.gmra.mrb[0].mxu0 %v51
    %v150 = vpop.f32.mrb[0].mxu0
    %v151 = vadd.f32 0.0, %v150
    %v152 = vpop.f32.mrb[0].mxu0
    %v153 = vpop.f32.mrb[0].mxu0
    %v154 = vpop.f32.mrb[0].mxu0
    %155 = vdwg.mxu0
    %v156 = vadd.f32 %v50, %v151
    %157 = vst [vmem:[#allocation2] sm:$0xff] %v156
    // Predicated region
    $region30: #{tpu_custom_call.1} parent=1 // pred_check
      %p158 = pneg %p45
    $region31: #{tpu_custom_call.1} parent=1 // pred_check_branch
      %160 = sbr.rel (%p158) target = $region33
    $region32: #{tpu_custom_call.1} parent=1 // pred_region
      %v161 = vld [vmem:[#allocation2] sm:$0xff]
      %v162 = vrot.slane %v161, 4
      %v163 = vadd.f32 %v161, %v162
      %v164 = vrot.slane %v163, 2
      %v165 = vadd.f32 %v163, %v164
      %v166 = vrot.slane %v165, 1
      %v167 = vadd.f32 %v165, %v166
      %v168 = vmul.f32 %v161, %v161
      %v169 = vrot.slane %v168, 4
      %v170 = vadd.f32 %v168, %v169
      %v171 = vrot.slane %v170, 2
      %v172 = vadd.f32 %v170, %v171
      %v173 = vrot.slane %v172, 1
      %v174 = vadd.f32 %v172, %v173
      %v175 = vmul.f32 %v167, 0.125
      %v176 = vmul.f32 %v174, 0.125
      %v177 = vmul.f32 %v175, %v175
      %v178 = vsub.f32 %v176, %v177
      %v179 = vadd.f32 %v178, 1e-05
      %v180 = vrsqrt.pop %v179
      %v181 = vld [vmem:[%s2] sm:$0x1]
      %v182 = vmul.f32 %v181, %v180
      %v183 = vld [vmem:[%s3] sm:$0x1]
      %v184 = vmul.f32 %v175, %v182
      %v185 = vsub.f32 %v183, %v184
      %v187 = vlaneseq
      %v188 = vshrl.u32 %v187, 7
      %v189 = vsub.s32 0, %v188
      %v190 = vrot.slane %v182, %v189
      %v192 = vmul.f32 %v161, %v190
      %v194 = vlaneseq
      %v195 = vshrl.u32 %v194, 7
      %v196 = vsub.s32 0, %v195
      %v197 = vrot.slane %v185, %v196
      %v199 = vadd.f32 %v192, %v197
      %v200 = vmax.f32 %v199, 0.0
      %201 = vst [vmem:[#allocation8] sm:$0xff] %v200
    $region33: #{tpu_custom_call.1} parent=1 // pred_fallthru
      _
    // Predicated region
    $region34: #{tpu_custom_call.1} parent=1 // pred_check
      _
    $region35: #{tpu_custom_call.1} parent=1 // pred_check_branch
      %203 = sbr.rel (0) target = $region37
    $region36: #{tpu_custom_call.1} parent=1 // pred_region
      %s205 = ssub.s32 128, 128
      %206 = vsyncadd [#allocation5], %s205
      %s208 = sshll.u32 [#allocation8], 4
      %s209 = int_to_ptr.vmem [resolvable:$true] %s208
      %211 = dma.vmem_to_hbm [thread:$0]  %s209, 128, %s4, [#allocation5]
    $region37: #{tpu_custom_call.1} parent=1 // pred_fallthru
      _
    // Predicated region
    $region38: #{tpu_custom_call.1} parent=1 // pred_check
      _
    $region39: #{tpu_custom_call.1} parent=1 // pred_check_branch
      %213 = sbr.rel (0) target = $region41
    $region40: #{tpu_custom_call.1} parent=1 // pred_region
      %214 = dma.done [#allocation5], 128
    $region41: #{tpu_custom_call.1} parent=1 // pred_fallthru
      _
    %215 = vsyncpa [#allocation4], 1
    %216 = vsyncpa [#allocation7], 1
    %217 = vsyncpa [#allocation5], 1

</llo_original>
